<compile_context>
chip_gen: v7x
topology: tpu7x:2x2x1
jax: 0.10.0
libtpu: 0.0.40
codegen_flags: <defaults>
</compile_context>

<pallas_src>
import math

import jax
import jax.numpy as jnp
from jax.experimental import pallas as pl
from jax.experimental.pallas import tpu as pltpu

_LANES = 128
_LN2 = math.log(2.0)


def _reduce_kernel(pred_ref, tgt_ref, aux_ref, out_ref):
    """Per-sample partial reductions, accumulated across the chunk grid axis.

    out_ref is an (8, 128) f32 block resident across the chunk axis (its index
    map depends only on the batch index).  Row layout (lane vectors; summed
    over lanes in the wrapper):
      0: sum(target * pred)      3: sum(relu(pred) + log1p(exp(-|pred|)))
      1: sum(target)             4: sum(aux * pred)
      2: sum(pred)               5: sum(aux)
    Rows 6-7 are unused padding (keeps the block (8, 128)-aligned).
    """
    c = pl.program_id(1)

    @pl.when(c == 0)
    def _():
        out_ref[...] = jnp.zeros_like(out_ref)

    p = pred_ref[...].astype(jnp.float32)      # (TILE_S, 128) logits
    t = tgt_ref[...].astype(jnp.float32)
    a = aux_ref[...].astype(jnp.float32)

    # BCEWithLogits elementwise = relu(x) - x*y + log1p(exp(-|x|)).
    # `shared` is the y-independent part; the "- x*y" term is recovered in the
    # wrapper from the intersection sums (bce_sum = sum(shared) - inter).
    shared = jnp.maximum(p, 0.0) + jnp.log1p(jnp.exp(-jnp.abs(p)))

    # Sublane (VPU) reductions only; the cross-lane reduce happens once, on the
    # tiny (B, 8, 128) kernel output, outside the kernel.
    out_ref[0:1, :] += jnp.sum(t * p, axis=0, keepdims=True)
    out_ref[1:2, :] += jnp.sum(t, axis=0, keepdims=True)
    out_ref[2:3, :] += jnp.sum(p, axis=0, keepdims=True)
    out_ref[3:4, :] += jnp.sum(shared, axis=0, keepdims=True)
    out_ref[4:5, :] += jnp.sum(a * p, axis=0, keepdims=True)
    out_ref[5:6, :] += jnp.sum(a, axis=0, keepdims=True)


def _round_up(x, m):
    return (x + m - 1) // m * m


def dice_bce_with_logits_loss_v1(outputs, target, individual_mask, from_train,
                                 *, smooth=1e-6, numerator=1.0, denominator=1.0,
                                 base_weight=0.5, aux_weight=0.5,
                                 base_bce_weight=0.5, aux_bce_weight=0.5,
                                 max_tile_sublanes=2048):
    B, C, H, W = outputs.shape
    n = C * H * W

    # Flatten each sample and (if needed) zero-pad to a whole number of
    # (tile_s, 128) blocks.  No dtype casts here — inputs stream in their
    # native dtype and are cast inside the kernel.
    s = pl.cdiv(n, _LANES)
    tile_s = min(max_tile_sublanes, _round_up(s, 8))   # multiple of 8
    s_pad = _round_up(s, tile_s)
    n_pad = s_pad * _LANES
    nchunks = s_pad // tile_s

    def prep(x):
        x = x.reshape(B, n)
        if n_pad != n:
            x = jnp.pad(x, ((0, 0), (0, n_pad - n)))
        return x.reshape(B * s_pad, _LANES)

    pred2 = prep(outputs)
    tgt2 = prep(target)
    aux2 = prep(individual_mask)

    in_spec = pl.BlockSpec((tile_s, _LANES), lambda b, c: (b * nchunks + c, 0))
    out_spec = pl.BlockSpec((8, _LANES), lambda b, c: (b, 0))

    partials = pl.pallas_call(
        _reduce_kernel,
        out_shape=jax.ShapeDtypeStruct((B * 8, _LANES), jnp.float32),
        grid=(B, nchunks),
        in_specs=[in_spec, in_spec, in_spec],
        out_specs=out_spec,
        compiler_params=pltpu.CompilerParams(
            dimension_semantics=("parallel", "arbitrary"),
            vmem_limit_bytes=32 * 1024 * 1024,
        ),
    )(pred2, tgt2, aux2)

    # Single cross-lane reduce on the tiny result.
    per_sample = partials.reshape(B, 8, _LANES).sum(axis=-1)     # (B, 8) f32
    inter_b = per_sample[:, 0]
    s_t_b = per_sample[:, 1]
    s_p_b = per_sample[:, 2]
    shared_b = per_sample[:, 3]
    inter_a_b = per_sample[:, 4]
    s_a_b = per_sample[:, 5]

    # Zero padding contributes relu(0) + log1p(exp(0)) = ln(2) per padded
    # element to `shared` only; correct for it exactly.
    pad_corr = (n_pad - n) * _LN2

    # Base dice + BCE (DiceLossWithConstantCorrection applied to raw logits,
    # exactly as in the PyTorch module).
    inter = inter_b.sum()
    dice = (2.0 * inter + smooth + numerator) / (
        s_t_b.sum() + s_p_b.sum() + smooth + denominator)
    bce = (shared_b.sum() - inter - B * pad_corr) / jnp.float32(B * n)

    # Aux (from_train-selected) dice + BCE; selection is linear so it is
    # applied to the per-sample sums here instead of inside the kernel.
    sel = from_train.astype(jnp.float32)
    n_sel = sel.sum()
    inter_a = (sel * inter_a_b).sum()
    aux_dice_raw = (2.0 * inter_a + smooth + numerator) / (
        (sel * s_a_b).sum() + (sel * s_p_b).sum() + smooth + denominator)
    aux_bce_raw = (sel * (shared_b - inter_a_b - pad_corr)).sum() / jnp.maximum(
        n_sel * n, 1.0)
    has_sel = n_sel > 0.0
    aux_dice = jnp.where(has_sel, aux_dice_raw, 0.0)
    aux_bce = jnp.where(has_sel, aux_bce_raw, 0.0)

    dice_loss = dice * base_weight + aux_dice * aux_weight
    bce_loss = bce * base_bce_weight + aux_bce * aux_bce_weight
    return dice_loss + bce_loss


def _reference_loss(outputs, target, individual_mask, from_train,
                    smooth=1e-6, numerator=1.0, denominator=1.0,
                    base_weight=0.5, aux_weight=0.5,
                    base_bce_weight=0.5, aux_bce_weight=0.5):
    """Pure-JAX reference mirroring the PyTorch forward."""
    def dice(p, l):
        p = p.reshape(-1).astype(jnp.float32)
        l = l.reshape(-1).astype(jnp.float32)
        inter = jnp.sum(l * p)
        return (2.0 * inter + smooth + numerator) / (
            jnp.sum(l) + jnp.sum(p) + smooth + denominator)

    def bce_mean(x, y):
        x = x.astype(jnp.float32)
        y = y.astype(jnp.float32)
        return jnp.mean(jnp.maximum(x, 0.0) - x * y + jnp.log1p(jnp.exp(-jnp.abs(x))))

    loss = dice(outputs, target)
    bce_loss = bce_mean(outputs, target)
    sel = from_train.astype(bool)
    n_sel = int(jnp.sum(sel))
    if n_sel > 0:
        aux_loss = dice(outputs[sel], individual_mask[sel])
        aux_bce = bce_mean(outputs[sel], individual_mask[sel])
    else:
        aux_loss = jnp.float32(0.0)
        aux_bce = jnp.float32(0.0)
    d = loss * base_weight + aux_loss * aux_weight
    b = bce_loss * base_bce_weight + aux_bce * aux_bce_weight
    return d + b


if __name__ == "__main__":
    key = jax.random.PRNGKey(0)
    k1, k2, k3 = jax.random.split(key, 3)

    B, C, H, W = 2, 4, 16, 16
    outputs = jax.random.normal(k1, (B, C, H, W), dtype=jnp.float32)          # logits
    target = jax.random.bernoulli(k2, 0.3, (B, C, H, W)).astype(jnp.float32)  # batch['target']
    individual_mask = jax.random.bernoulli(k3, 0.3, (B, C, H, W)).astype(jnp.float32)
    from_train = jnp.array([1, 0], dtype=jnp.int32)                           # batch['from_train']

    loss = dice_bce_with_logits_loss_v1(outputs, target, individual_mask, from_train)
    loss = jax.block_until_ready(loss)

    ref = _reference_loss(outputs, target, individual_mask, from_train)
    assert jnp.allclose(loss, ref, rtol=1e-5, atol=1e-5), (loss, ref)

    print("KERNEL_OK")
</pallas_src>

<mosaic_0001>
module attributes {stable_mosaic.version = 11 : i64} {
  func.func @_reduce_kernel(%arg0: i32, %arg1: i32, %arg2: memref<8x128xf32, #tpu.memory_space<vmem>>, %arg3: memref<8x128xf32, #tpu.memory_space<vmem>>, %arg4: memref<8x128xf32, #tpu.memory_space<vmem>>, %arg5: memref<8x128xf32, #tpu.memory_space<vmem>>) attributes {dimension_semantics = [#tpu.dimension_semantics<parallel>, #tpu.dimension_semantics<arbitrary>], iteration_bounds = array<i64: 2, 1>, scalar_prefetch = 0 : i64, scratch_operands = 0 : i64, tpu.core_type = #tpu.core_type<tc>, window_params = [{transform_indices = @transform_0, window_bounds = array<i64: 8, 128>}, {transform_indices = @transform_1, window_bounds = array<i64: 8, 128>}, {transform_indices = @transform_2, window_bounds = array<i64: 8, 128>}, {transform_indices = @transform_3, window_bounds = array<i64: 8, 128>}]} {
    %c0_i32 = arith.constant 0 : i32
    %0 = arith.cmpi eq, %arg1, %c0_i32 : i32
    %1 = arith.extui %0 : i1 to i32
    %c0_i32_0 = arith.constant 0 : i32
    %2 = arith.cmpi ne, %1, %c0_i32_0 : i32
    scf.if %2 {
      %cst_32 = arith.constant 0.000000e+00 : f32
      %46 = vector.broadcast %cst_32 : f32 to vector<8x128xf32>
      %c0_33 = arith.constant 0 : index
      %c0_34 = arith.constant 0 : index
      %47 = vector.load %arg5[%c0_33, %c0_34] : memref<8x128xf32, #tpu.memory_space<vmem>>, vector<8x128xf32>
      tpu.vector_store %arg5[%c0_33, %c0_34], %46 {strides = array<i32>} : memref<8x128xf32, #tpu.memory_space<vmem>>, vector<8x128xf32>,
    } else {
    }
    %c0 = arith.constant 0 : index
    %c0_1 = arith.constant 0 : index
    %3 = vector.load %arg2[%c0, %c0_1] : memref<8x128xf32, #tpu.memory_space<vmem>>, vector<8x128xf32>
    %c0_2 = arith.constant 0 : index
    %c0_3 = arith.constant 0 : index
    %4 = vector.load %arg3[%c0_2, %c0_3] : memref<8x128xf32, #tpu.memory_space<vmem>>, vector<8x128xf32>
    %c0_4 = arith.constant 0 : index
    %c0_5 = arith.constant 0 : index
    %5 = vector.load %arg4[%c0_4, %c0_5] : memref<8x128xf32, #tpu.memory_space<vmem>>, vector<8x128xf32>
    %cst = arith.constant 0.000000e+00 : f32
    %6 = vector.broadcast %cst : f32 to vector<8x128xf32>
    %7 = arith.maximumf %3, %6 : vector<8x128xf32>
    %8 = math.absf %3 : vector<8x128xf32>
    %cst_6 = arith.constant 0.000000e+00 : f32
    %9 = vector.broadcast %cst_6 : f32 to vector<8x128xf32>
    %10 = arith.subf %9, %8 : vector<8x128xf32>
    %11 = math.exp %10 : vector<8x128xf32>
    %12 = math.log1p %11 : vector<8x128xf32>
    %13 = arith.addf %7, %12 : vector<8x128xf32>
    %c0_7 = arith.constant 0 : index
    %c0_8 = arith.constant 0 : index
    %14 = vector.load %arg5[%c0_7, %c0_8] : memref<8x128xf32, #tpu.memory_space<vmem>>, vector<1x128xf32>
    %15 = arith.mulf %4, %3 : vector<8x128xf32>
    %cst_9 = arith.constant dense<0.000000e+00> : vector<128xf32>
    %16 = vector.multi_reduction <add>, %15, %cst_9 [0] : vector<8x128xf32> to vector<128xf32>
    %17 = vector.shape_cast %16 : vector<128xf32> to vector<1x128xf32>
    %18 = arith.addf %14, %17 : vector<1x128xf32>
    %c0_10 = arith.constant 0 : index
    %c0_11 = arith.constant 0 : index
    %19 = vector.load %arg5[%c0_10, %c0_11] : memref<8x128xf32, #tpu.memory_space<vmem>>, vector<1x128xf32>
    tpu.vector_store %arg5[%c0_10, %c0_11], %18 {strides = array<i32>} : memref<8x128xf32, #tpu.memory_space<vmem>>, vector<1x128xf32>,
    %c1 = arith.constant 1 : index
    %c0_12 = arith.constant 0 : index
    %20 = vector.load %arg5[%c1, %c0_12] : memref<8x128xf32, #tpu.memory_space<vmem>>, vector<1x128xf32>
    %cst_13 = arith.constant dense<0.000000e+00> : vector<128xf32>
    %21 = vector.multi_reduction <add>, %4, %cst_13 [0] : vector<8x128xf32> to vector<128xf32>
    %22 = vector.shape_cast %21 : vector<128xf32> to vector<1x128xf32>
    %23 = arith.addf %20, %22 : vector<1x128xf32>
    %c1_14 = arith.constant 1 : index
    %c0_15 = arith.constant 0 : index
    %24 = vector.load %arg5[%c1_14, %c0_15] : memref<8x128xf32, #tpu.memory_space<vmem>>, vector<1x128xf32>
    tpu.vector_store %arg5[%c1_14, %c0_15], %23 {strides = array<i32>} : memref<8x128xf32, #tpu.memory_space<vmem>>, vector<1x128xf32>,
    %c2 = arith.constant 2 : index
    %c0_16 = arith.constant 0 : index
    %25 = vector.load %arg5[%c2, %c0_16] : memref<8x128xf32, #tpu.memory_space<vmem>>, vector<1x128xf32>
    %cst_17 = arith.constant dense<0.000000e+00> : vector<128xf32>
    %26 = vector.multi_reduction <add>, %3, %cst_17 [0] : vector<8x128xf32> to vector<128xf32>
    %27 = vector.shape_cast %26 : vector<128xf32> to vector<1x128xf32>
    %28 = arith.addf %25, %27 : vector<1x128xf32>
    %c2_18 = arith.constant 2 : index
    %c0_19 = arith.constant 0 : index
    %29 = vector.load %arg5[%c2_18, %c0_19] : memref<8x128xf32, #tpu.memory_space<vmem>>, vector<1x128xf32>
    tpu.vector_store %arg5[%c2_18, %c0_19], %28 {strides = array<i32>} : memref<8x128xf32, #tpu.memory_space<vmem>>, vector<1x128xf32>,
    %c3 = arith.constant 3 : index
    %c0_20 = arith.constant 0 : index
    %30 = vector.load %arg5[%c3, %c0_20] : memref<8x128xf32, #tpu.memory_space<vmem>>, vector<1x128xf32>
    %cst_21 = arith.constant dense<0.000000e+00> : vector<128xf32>
    %31 = vector.multi_reduction <add>, %13, %cst_21 [0] : vector<8x128xf32> to vector<128xf32>
    %32 = vector.shape_cast %31 : vector<128xf32> to vector<1x128xf32>
    %33 = arith.addf %30, %32 : vector<1x128xf32>
    %c3_22 = arith.constant 3 : index
    %c0_23 = arith.constant 0 : index
    %34 = vector.load %arg5[%c3_22, %c0_23] : memref<8x128xf32, #tpu.memory_space<vmem>>, vector<1x128xf32>
    tpu.vector_store %arg5[%c3_22, %c0_23], %33 {strides = array<i32>} : memref<8x128xf32, #tpu.memory_space<vmem>>, vector<1x128xf32>,
    %c4 = arith.constant 4 : index
    %c0_24 = arith.constant 0 : index
    %35 = vector.load %arg5[%c4, %c0_24] : memref<8x128xf32, #tpu.memory_space<vmem>>, vector<1x128xf32>
    %36 = arith.mulf %5, %3 : vector<8x128xf32>
    %cst_25 = arith.constant dense<0.000000e+00> : vector<128xf32>
    %37 = vector.multi_reduction <add>, %36, %cst_25 [0] : vector<8x128xf32> to vector<128xf32>
    %38 = vector.shape_cast %37 : vector<128xf32> to vector<1x128xf32>
    %39 = arith.addf %35, %38 : vector<1x128xf32>
    %c4_26 = arith.constant 4 : index
    %c0_27 = arith.constant 0 : index
    %40 = vector.load %arg5[%c4_26, %c0_27] : memref<8x128xf32, #tpu.memory_space<vmem>>, vector<1x128xf32>
    tpu.vector_store %arg5[%c4_26, %c0_27], %39 {strides = array<i32>} : memref<8x128xf32, #tpu.memory_space<vmem>>, vector<1x128xf32>,
    %c5 = arith.constant 5 : index
    %c0_28 = arith.constant 0 : index
    %41 = vector.load %arg5[%c5, %c0_28] : memref<8x128xf32, #tpu.memory_space<vmem>>, vector<1x128xf32>
    %cst_29 = arith.constant dense<0.000000e+00> : vector<128xf32>
    %42 = vector.multi_reduction <add>, %5, %cst_29 [0] : vector<8x128xf32> to vector<128xf32>
    %43 = vector.shape_cast %42 : vector<128xf32> to vector<1x128xf32>
    %44 = arith.addf %41, %43 : vector<1x128xf32>
    %c5_30 = arith.constant 5 : index
    %c0_31 = arith.constant 0 : index
    %45 = vector.load %arg5[%c5_30, %c0_31] : memref<8x128xf32, #tpu.memory_space<vmem>>, vector<1x128xf32>
    tpu.vector_store %arg5[%c5_30, %c0_31], %44 {strides = array<i32>} : memref<8x128xf32, #tpu.memory_space<vmem>>, vector<1x128xf32>,
    return
  }
  func.func @transform_0(%arg0: i32, %arg1: i32) -> (i32, i32) {
    %c1_i32 = arith.constant 1 : i32
    %0 = arith.muli %arg0, %c1_i32 : i32
    %1 = arith.addi %0, %arg1 : i32
    %c0_i32 = arith.constant 0 : i32
    %c0_i32_0 = arith.constant 0 : i32
    return %1, %c0_i32 : i32, i32
  }
  func.func @transform_1(%arg0: i32, %arg1: i32) -> (i32, i32) {
    %c1_i32 = arith.constant 1 : i32
    %0 = arith.muli %arg0, %c1_i32 : i32
    %1 = arith.addi %0, %arg1 : i32
    %c0_i32 = arith.constant 0 : i32
    %c0_i32_0 = arith.constant 0 : i32
    return %1, %c0_i32 : i32, i32
  }
  func.func @transform_2(%arg0: i32, %arg1: i32) -> (i32, i32) {
    %c1_i32 = arith.constant 1 : i32
    %0 = arith.muli %arg0, %c1_i32 : i32
    %1 = arith.addi %0, %arg1 : i32
    %c0_i32 = arith.constant 0 : i32
    %c0_i32_0 = arith.constant 0 : i32
    return %1, %c0_i32 : i32, i32
  }
  func.func @transform_3(%arg0: i32, %arg1: i32) -> (i32, i32) {
    %c0_i32 = arith.constant 0 : i32
    %c0_i32_0 = arith.constant 0 : i32
    return %arg0, %c0_i32 : i32, i32
  }
}

</mosaic_0001>

<llo_original>
// kernel: tpu_custom_call.1
$region0: #{tpu_custom_call.1}
  #allocation0 [shape = 'u32[]', space=smem, size = 0x4, offset = 0x4, fixed_abs, tag = 'smem constant byte address 0x4 - core index']
  #allocation1 [shape = 'u32[144,128]{1,0:T(1,128)}', space=vmem, size = 0x12000, scoped, tag = 'internal scratch']
  %s0 = inlined_call_operand.hbm [shape: f32[16,128], index: 0, kind: input, shape index: {}]
  %s1 = inlined_call_operand.hbm [shape: f32[16,128], index: 1, kind: input, shape index: {}]
  %s2 = inlined_call_operand.hbm [shape: f32[16,128], index: 2, kind: input, shape index: {}]
  %s3 = inlined_call_operand.hbm [shape: f32[16,128], index: 3, kind: output, shape index: {}]
  %s4 = sld [smem:[#allocation0]]
  $region61: #{tpu_custom_call.1} parent=0
    _
  %s6 = ssub.s32 1, %s4
  %s7 = scalar_select 0, %s6, %s4
  $region1: #{tpu_custom_call.1} parent=0
    #allocation2 [shape = 'u8[8192]{0}', space=vmem, size = 0x2000, scoped, tag = 'input window, operand 0']
    #allocation3 [shape = 's32[2]{0}', space=sflag, size = 0x8, scoped, tag = 'scoped memory for tpu_custom_call.1']
    #allocation4 [shape = 's32[2]{0}', space=sflag, size = 0x8, scoped, tag = 'scoped memory for tpu_custom_call.1']
    #allocation5 [shape = 'u8[8192]{0}', space=vmem, size = 0x2000, scoped, tag = 'input window, operand 1']
    #allocation6 [shape = 's32[2]{0}', space=sflag, size = 0x8, scoped, tag = 'scoped memory for tpu_custom_call.1']
    #allocation7 [shape = 'u8[8192]{0}', space=vmem, size = 0x2000, scoped, tag = 'input window, operand 2']
    #allocation8 [shape = 'u8[8192]{0}', space=vmem, size = 0x2000, scoped, tag = 'output window, operand 0']
    %8 = vsyncpa [#allocation3], 0
    %s9 = scalar_lea.sflag [#allocation3], 1
    %10 = vsyncpa %s9, 0
    %11 = vsyncpa [#allocation6], 0
    %s12 = scalar_lea.sflag [#allocation6], 1
    %13 = vsyncpa %s12, 0
    %14 = vsyncpa [#allocation4], 0
    %s15 = scalar_lea.sflag [#allocation4], 1
    %16 = vsyncpa %s15, 0
    loop: start=0, step=1, limit=4
    $region2: #{tpu_custom_call.1} parent=1 // loop_pre_header
      _
    $region3: #{tpu_custom_call.1} parent=1 // loop_header
      %s18 = sphi 0, %s22
      %p19 = scmp.ge.s32.totalorder %s18, 4
      %s25 = sphi 0, %s37
      %s26 = sphi 0, %s33
      %s27 = sphi 0, %s25
      %s28 = sphi 0, %s26
      %s29 = sphi 0, %s27
      %s30 = sphi 0, %s28
      %s42 = sphi 0, %s44
      %s45 = sphi 0, %s42
      %s46 = sphi 0, %s45
      %s62 = sphi 0, %s46
      %s70 = sphi 0, %s72
      %s73 = sphi 0, %s70
      %s74 = sphi 0, %s73
      %s90 = sphi 0, %s74
      %s98 = sphi 0, %s100
      %s101 = sphi 0, %s98
      %s102 = sphi 0, %s101
      %s118 = sphi 0, %s102
      %s124 = sphi 0, %s126
      %s127 = sphi 0, %s124
      %s128 = sphi 0, %s127
      %s144 = sphi 0, %s128
    $region4: #{tpu_custom_call.1} parent=1 // loop_header_branch
      %21 = sbr.rel (%p19) target = $region8
    $region5: #{tpu_custom_call.1} parent=1 // loop_body
      %s23 = ssub.s32 %s18, 1
      %s24 = ssub.s32 %s18, 2
      %s31 = sadd.s32 1, %s26
      %p32 = scmp.ge.s32.totalorder %s31, 1
      %s33 = scalar_select %p32, 0, %s31
      %s34 = sadd.s32 1, %s25
      %s35 = scalar_select %p32, %s34, %s25
      %p36 = scmp.ge.s32.totalorder %s35, 2
      %s37 = scalar_select %p36, 0, %s35
      %s38 = sadd.s32 %s25, %s26
      %s39 = sadd.s32 %s37, %s33
      %s40 = ssub.s32 %s38, %s39
      %p41 = scmp.eq.s32.totalorder %s40, 0
      %s43 = sadd.s32 %s42, 1
      %s44 = scalar_select %p41, %s42, %s43
      %p47 = pneg %p41
      %p48 = scmp.eq.s32.totalorder %s18, 1
      %p49 = por %p47, %p48
      %p50 = scmp.ne.s32.totalorder %s42, %s45
      %p51 = scmp.eq.s32.totalorder %s18, 0
      %p52 = por %p50, %p51
      %p53 = scmp.ne.s32.totalorder %s42, %s45
      %p54 = scmp.eq.s32.totalorder %s23, 1
      %p55 = por %p53, %p54
      %p56 = scmp.ne.s32.totalorder %s45, %s46
      %p57 = scmp.eq.s32.totalorder %s23, 0
      %p58 = por %p56, %p57
      %p59 = scmp.ne.s32.totalorder %s45, %s46
      %p60 = scmp.eq.s32.totalorder %s24, 1
      %p61 = por %p59, %p60
      %p63 = scmp.ne.s32.totalorder %s46, %s62
      %p64 = scmp.eq.s32.totalorder %s24, 0
      %p65 = por %p63, %p64
      %s66 = sadd.s32 %s25, %s26
      %s67 = sadd.s32 %s37, %s33
      %s68 = ssub.s32 %s66, %s67
      %p69 = scmp.eq.s32.totalorder %s68, 0
      %s71 = sadd.s32 %s70, 1
      %s72 = scalar_select %p69, %s70, %s71
      %p75 = pneg %p69
      %p76 = scmp.eq.s32.totalorder %s18, 1
      %p77 = por %p75, %p76
      %p78 = scmp.ne.s32.totalorder %s70, %s73
      %p79 = scmp.eq.s32.totalorder %s18, 0
      %p80 = por %p78, %p79
      %p81 = scmp.ne.s32.totalorder %s70, %s73
      %p82 = scmp.eq.s32.totalorder %s23, 1
      %p83 = por %p81, %p82
      %p84 = scmp.ne.s32.totalorder %s73, %s74
      %p85 = scmp.eq.s32.totalorder %s23, 0
      %p86 = por %p84, %p85
      %p87 = scmp.ne.s32.totalorder %s73, %s74
      %p88 = scmp.eq.s32.totalorder %s24, 1
      %p89 = por %p87, %p88
      %p91 = scmp.ne.s32.totalorder %s74, %s90
      %p92 = scmp.eq.s32.totalorder %s24, 0
      %p93 = por %p91, %p92
      %s94 = sadd.s32 %s25, %s26
      %s95 = sadd.s32 %s37, %s33
      %s96 = ssub.s32 %s94, %s95
      %p97 = scmp.eq.s32.totalorder %s96, 0
      %s99 = sadd.s32 %s98, 1
      %s100 = scalar_select %p97, %s98, %s99
      %p103 = pneg %p97
      %p104 = scmp.eq.s32.totalorder %s18, 1
      %p105 = por %p103, %p104
      %p106 = scmp.ne.s32.totalorder %s98, %s101
      %p107 = scmp.eq.s32.totalorder %s18, 0
      %p108 = por %p106, %p107
      %p109 = scmp.ne.s32.totalorder %s98, %s101
      %p110 = scmp.eq.s32.totalorder %s23, 1
      %p111 = por %p109, %p110
      %p112 = scmp.ne.s32.totalorder %s101, %s102
      %p113 = scmp.eq.s32.totalorder %s23, 0
      %p114 = por %p112, %p113
      %p115 = scmp.ne.s32.totalorder %s101, %s102
      %p116 = scmp.eq.s32.totalorder %s24, 1
      %p117 = por %p115, %p116
      %p119 = scmp.ne.s32.totalorder %s102, %s118
      %p120 = scmp.eq.s32.totalorder %s24, 0
      %p121 = por %p119, %p120
      %s122 = ssub.s32 %s25, %s37
      %p123 = scmp.eq.s32.totalorder %s122, 0
      %s125 = sadd.s32 %s124, 1
      %s126 = scalar_select %p123, %s124, %s125
      %p129 = pneg %p123
      %p130 = scmp.eq.s32.totalorder %s18, 1
      %p131 = por %p129, %p130
      %p132 = scmp.ne.s32.totalorder %s124, %s127
      %p133 = scmp.eq.s32.totalorder %s18, 0
      %p134 = por %p132, %p133
      %p135 = scmp.ne.s32.totalorder %s124, %s127
      %p136 = scmp.eq.s32.totalorder %s23, 1
      %p137 = por %p135, %p136
      %p138 = scmp.ne.s32.totalorder %s127, %s128
      %p139 = scmp.eq.s32.totalorder %s23, 0
      %p140 = por %p138, %p139
      %p141 = scmp.ne.s32.totalorder %s127, %s128
      %p142 = scmp.eq.s32.totalorder %s24, 1
      %p143 = por %p141, %p142
      %p145 = scmp.ne.s32.totalorder %s128, %s144
      %p146 = scmp.eq.s32.totalorder %s24, 0
      %p147 = por %p145, %p146
      %p148 = scmp.le.s32.totalorder 1, %s18
      %p149 = scmp.lt.s32.totalorder %s18, 3
      %p150 = pnand %p148, %p149
      %p151 = pneg %p150
      // Predicated region
      $region9: #{tpu_custom_call.1} parent=5 // pred_check
        _
      $region10: #{tpu_custom_call.1} parent=5 // pred_check_branch
        %153 = sbr.rel (%p150) target = $region12
      $region11: #{tpu_custom_call.1} parent=5 // pred_region
        %s154 = ssub.s32 %s18, 1
      $region12: #{tpu_custom_call.1} parent=5 // pred_fallthru
        _
      %p155 = scmp.lt.s32.totalorder %s18, 2
      // Predicated region
      $region13: #{tpu_custom_call.1} parent=5 // pred_check
        %p156 = pneg %p155
      $region14: #{tpu_custom_call.1} parent=5 // pred_check_branch
        %158 = sbr.rel (%p156) target = $region16
      $region15: #{tpu_custom_call.1} parent=5 // pred_region
        // Predicated region
        $region17: #{tpu_custom_call.1} parent=15 // pred_check
          %p159 = pneg %p52
        $region18: #{tpu_custom_call.1} parent=15 // pred_check_branch
          %161 = sbr.rel (%p159) target = $region20
        $region19: #{tpu_custom_call.1} parent=15 // pred_region
          %s162 = sand.u32 %s42, 1
          %s163 = scalar_lea.sflag [#allocation3], %s162
          %s164 = sand.u32 %s42, 1
          %s165 = smul.addr %s164, 8
          %s166 = scalar_lea.vmem [#allocation2], %s165
          %s167 = sadd.s32 %s25, %s26
          %s169 = ssub.s32 128, 128
          %170 = vsyncadd %s163, %s169
          %s171 = smul.addr %s167, 128
          %s172 = scalar_lea.hbm %s0, %s171
          %s174 = sshll.u32 %s166, 4
          %s175 = int_to_ptr.vmem [resolvable:$true] %s174
          %177 = dma.hbm_to_vmem [thread:$0]  %s172, 128, %s175, %s163
        $region20: #{tpu_custom_call.1} parent=15 // pred_fallthru
          _
        // Predicated region
        $region21: #{tpu_custom_call.1} parent=15 // pred_check
          %p178 = pneg %p80
        $region22: #{tpu_custom_call.1} parent=15 // pred_check_branch
          %180 = sbr.rel (%p178) target = $region24
        $region23: #{tpu_custom_call.1} parent=15 // pred_region
          %s181 = sand.u32 %s18, 1
          %s182 = scalar_lea.sflag [#allocation6], %s181
          %s183 = sand.u32 %s70, 1
          %s184 = smul.addr %s183, 8
          %s185 = scalar_lea.vmem [#allocation5], %s184
          %s186 = sadd.s32 %s25, %s26
          %s188 = ssub.s32 128, 128
          %189 = vsyncadd %s182, %s188
          %s190 = smul.addr %s186, 128
          %s191 = scalar_lea.hbm %s1, %s190
          %s193 = sshll.u32 %s185, 4
          %s194 = int_to_ptr.vmem [resolvable:$true] %s193
          %196 = dma.hbm_to_vmem [thread:$0]  %s191, 128, %s194, %s182
        $region24: #{tpu_custom_call.1} parent=15 // pred_fallthru
          _
        // Predicated region
        $region25: #{tpu_custom_call.1} parent=15 // pred_check
          %p197 = pneg %p108
        $region26: #{tpu_custom_call.1} parent=15 // pred_check_branch
          %199 = sbr.rel (%p197) target = $region28
        $region27: #{tpu_custom_call.1} parent=15 // pred_region
          %s200 = sand.u32 %s18, 1
          %s201 = scalar_lea.sflag [#allocation6], %s200
          %s202 = sand.u32 %s98, 1
          %s203 = smul.addr %s202, 8
          %s204 = scalar_lea.vmem [#allocation7], %s203
          %s205 = sadd.s32 %s25, %s26
          %s207 = ssub.s32 128, 128
          %208 = vsyncadd %s201, %s207
          %s209 = smul.addr %s205, 128
          %s210 = scalar_lea.hbm %s2, %s209
          %s212 = sshll.u32 %s204, 4
          %s213 = int_to_ptr.vmem [resolvable:$true] %s212
          %215 = dma.hbm_to_vmem [thread:$0]  %s210, 128, %s213, %s201
        $region28: #{tpu_custom_call.1} parent=15 // pred_fallthru
          _
      $region16: #{tpu_custom_call.1} parent=5 // pred_fallthru
        _
      %p216 = scmp.le.s32.totalorder 1, %s18
      %p217 = scmp.lt.s32.totalorder %s18, 3
      %p218 = pnand %p216, %p217
      %p219 = pneg %p218
      // Predicated region
      $region29: #{tpu_custom_call.1} parent=5 // pred_check
        _
      $region30: #{tpu_custom_call.1} parent=5 // pred_check_branch
        %221 = sbr.rel (%p218) target = $region32
      $region31: #{tpu_custom_call.1} parent=5 // pred_region
        %s222 = ssub.s32 %s18, 1
        %s223 = sand.u32 %s45, 1
        %s224 = scalar_lea.sflag [#allocation3], %s223
        %s225 = sand.u32 %s45, 1
        %s226 = smul.addr %s225, 8
        %s227 = scalar_lea.vmem [#allocation2], %s226
        // Predicated region
        $region33: #{tpu_custom_call.1} parent=31 // pred_check
          %p228 = pneg %p58
        $region34: #{tpu_custom_call.1} parent=31 // pred_check_branch
          %230 = sbr.rel (%p228) target = $region36
        $region35: #{tpu_custom_call.1} parent=31 // pred_region
          %231 = dma.done %s224, 128
        $region36: #{tpu_custom_call.1} parent=31 // pred_fallthru
          _
        %s232 = sand.u32 %s23, 1
        %s233 = scalar_lea.sflag [#allocation6], %s232
        %s234 = sand.u32 %s73, 1
        %s235 = smul.addr %s234, 8
        %s236 = scalar_lea.vmem [#allocation5], %s235
        // Predicated region
        $region37: #{tpu_custom_call.1} parent=31 // pred_check
          %p237 = pneg %p86
        $region38: #{tpu_custom_call.1} parent=31 // pred_check_branch
          %239 = sbr.rel (%p237) target = $region40
        $region39: #{tpu_custom_call.1} parent=31 // pred_region
          %240 = dma.done %s233, 128
        $region40: #{tpu_custom_call.1} parent=31 // pred_fallthru
          _
        %s241 = sand.u32 %s23, 1
        %s242 = scalar_lea.sflag [#allocation6], %s241
        %s243 = sand.u32 %s101, 1
        %s244 = smul.addr %s243, 8
        %s245 = scalar_lea.vmem [#allocation7], %s244
        // Predicated region
        $region41: #{tpu_custom_call.1} parent=31 // pred_check
          %p246 = pneg %p114
        $region42: #{tpu_custom_call.1} parent=31 // pred_check_branch
          %248 = sbr.rel (%p246) target = $region44
        $region43: #{tpu_custom_call.1} parent=31 // pred_region
          %249 = dma.done %s242, 128
        $region44: #{tpu_custom_call.1} parent=31 // pred_fallthru
          _
        %s250 = sand.u32 %s45, 1
        %s251 = scalar_lea.sflag [#allocation3], %s250
        %s252 = sand.u32 %s45, 1
        %s253 = smul.addr %s252, 8
        %s254 = scalar_lea.vmem [#allocation2], %s253
        %p255 = pneg %p58
        %p256 = pneg %p55
        %s257 = sand.u32 %s23, 1
        %s258 = scalar_lea.sflag [#allocation6], %s257
        %s259 = sand.u32 %s73, 1
        %s260 = smul.addr %s259, 8
        %s261 = scalar_lea.vmem [#allocation5], %s260
        %p262 = pneg %p86
        %p263 = pneg %p83
        %s264 = sand.u32 %s23, 1
        %s265 = scalar_lea.sflag [#allocation6], %s264
        %s266 = sand.u32 %s101, 1
        %s267 = smul.addr %s266, 8
        %s268 = scalar_lea.vmem [#allocation7], %s267
        %p269 = pneg %p114
        %p270 = pneg %p111
        %p271 = pneg %p140
        %p272 = pneg %p137
        %s273 = sand.u32 %s127, 1
        %s274 = scalar_lea.sflag [#allocation4], %s273
        %s275 = sand.u32 %s127, 1
        %s276 = smul.addr %s275, 8
        %s277 = scalar_lea.vmem [#allocation8], %s276
        %s278 = sadd.s32 %s27, %s28
        %s279 = sadd.s32 %s27, %s28
        %s280 = sadd.s32 %s27, %s28
        %p281 = scmp.eq.s32.totalorder %s28, 0
        // Predicated region
        $region45: #{tpu_custom_call.1} parent=31 // pred_check
          %p282 = pneg %p281
        $region46: #{tpu_custom_call.1} parent=31 // pred_check_branch
          %284 = sbr.rel (%p282) target = $region48
        $region47: #{tpu_custom_call.1} parent=31 // pred_region
          %285 = vst [vmem:[%s277] sm:$0xff] 0.0
        $region48: #{tpu_custom_call.1} parent=31 // pred_fallthru
          _
        %v286 = vld [vmem:[%s227] sm:$0xff]
        %v287 = vld [vmem:[%s236] sm:$0xff]
        %v288 = vld [vmem:[%s245] sm:$0xff]
        %v289 = vmax.f32 %v286, 0.0
        %v290 = vand.u32 2147483647, %v286
        %v291 = vsub.f32 0.0, %v290
        %v292 = vmul.f32 %v291, 1.442695
        %v293 = vpow.pop %v292
        %v294 = vadd.f32 %v293, 1.0
        %v295 = vlog2.pop %v294
        %v296 = vmul.f32 %v295, 0.6931472
        %v297 = vmul.f32 -0.5, %v293
        %v298 = vadd.f32 %v297, 1.0
        %v299 = vmul.f32 %v298, %v293
        %v300 = vand.u32 2147483647, %v293
        %vm301 = vcmp.lt.f32.partialorder %v300, 0.0004427343
        %v302 = vsel %vm301, %v299, %v296
        %v303 = vadd.f32 %v289, %v302
        %v304 = vld [vmem:[%s277] sm:$0x1]
        %v305 = vmul.f32 %v287, %v286
        %v306 = vrot.slane %v305, 4
        %v307 = vadd.f32 %v305, %v306
        %v308 = vrot.slane %v307, 2
        %v309 = vadd.f32 %v307, %v308
        %v310 = vrot.slane %v309, 1
        %v311 = vadd.f32 %v309, %v310
        %v312 = vadd.f32 %v304, %v311
        %313 = vst [vmem:[%s277] sm:$0x1] %v312
        %v314 = vld [vmem:[%s277 + $0x1] sm:$0x1]
        %v315 = vrot.slane %v287, 4
        %v316 = vadd.f32 %v287, %v315
        %v317 = vrot.slane %v316, 2
        %v318 = vadd.f32 %v316, %v317
        %v319 = vrot.slane %v318, 1
        %v320 = vadd.f32 %v318, %v319
        %v321 = vadd.f32 %v314, %v320
        %322 = vst [vmem:[%s277 + $0x1] sm:$0x1] %v321
        %v323 = vld [vmem:[%s277 + $0x2] sm:$0x1]
        %v324 = vrot.slane %v286, 4
        %v325 = vadd.f32 %v286, %v324
        %v326 = vrot.slane %v325, 2
        %v327 = vadd.f32 %v325, %v326
        %v328 = vrot.slane %v327, 1
        %v329 = vadd.f32 %v327, %v328
        %v330 = vadd.f32 %v323, %v329
        %331 = vst [vmem:[%s277 + $0x2] sm:$0x1] %v330
        %v332 = vld [vmem:[%s277 + $0x3] sm:$0x1]
        %v333 = vrot.slane %v303, 4
        %v334 = vadd.f32 %v303, %v333
        %v335 = vrot.slane %v334, 2
        %v336 = vadd.f32 %v334, %v335
        %v337 = vrot.slane %v336, 1
        %v338 = vadd.f32 %v336, %v337
        %v339 = vadd.f32 %v332, %v338
        %340 = vst [vmem:[%s277 + $0x3] sm:$0x1] %v339
        %v341 = vld [vmem:[%s277 + $0x4] sm:$0x1]
        %v342 = vmul.f32 %v288, %v286
        %v343 = vrot.slane %v342, 4
        %v344 = vadd.f32 %v342, %v343
        %v345 = vrot.slane %v344, 2
        %v346 = vadd.f32 %v344, %v345
        %v347 = vrot.slane %v346, 1
        %v348 = vadd.f32 %v346, %v347
        %v349 = vadd.f32 %v341, %v348
        %350 = vst [vmem:[%s277 + $0x4] sm:$0x1] %v349
        %v351 = vld [vmem:[%s277 + $0x5] sm:$0x1]
        %v352 = vrot.slane %v288, 4
        %v353 = vadd.f32 %v288, %v352
        %v354 = vrot.slane %v353, 2
        %v355 = vadd.f32 %v353, %v354
        %v356 = vrot.slane %v355, 1
        %v357 = vadd.f32 %v355, %v356
        %v358 = vadd.f32 %v351, %v357
        %359 = vst [vmem:[%s277 + $0x5] sm:$0x1] %v358
        %s360 = sand.u32 %s127, 1
        %s361 = scalar_lea.sflag [#allocation4], %s360
        %s362 = sand.u32 %s127, 1
        %s363 = smul.addr %s362, 8
        %s364 = scalar_lea.vmem [#allocation8], %s363
        // Predicated region
        $region49: #{tpu_custom_call.1} parent=31 // pred_check
          %p365 = pneg %p137
        $region50: #{tpu_custom_call.1} parent=31 // pred_check_branch
          %367 = sbr.rel (%p365) target = $region52
        $region51: #{tpu_custom_call.1} parent=31 // pred_region
          %s369 = ssub.s32 128, 128
          %370 = vsyncadd %s361, %s369
          %s371 = smul.addr %s27, 128
          %s372 = scalar_lea.hbm %s3, %s371
          %s374 = sshll.u32 %s364, 4
          %s375 = int_to_ptr.vmem [resolvable:$true] %s374
          %377 = dma.vmem_to_hbm [thread:$0]  %s375, 128, %s372, %s361
        $region52: #{tpu_custom_call.1} parent=31 // pred_fallthru
          _
      $region32: #{tpu_custom_call.1} parent=5 // pred_fallthru
        _
      %p378 = scmp.le.s32.totalorder 2, %s18
      // Predicated region
      $region53: #{tpu_custom_call.1} parent=5 // pred_check
        %p379 = pneg %p378
      $region54: #{tpu_custom_call.1} parent=5 // pred_check_branch
        %381 = sbr.rel (%p379) target = $region56
      $region55: #{tpu_custom_call.1} parent=5 // pred_region
        %s382 = ssub.s32 %s18, 2
        // Predicated region
        $region57: #{tpu_custom_call.1} parent=55 // pred_check
          %p383 = pneg %p143
        $region58: #{tpu_custom_call.1} parent=55 // pred_check_branch
          %385 = sbr.rel (%p383) target = $region60
        $region59: #{tpu_custom_call.1} parent=55 // pred_region
          %s386 = sand.u32 %s128, 1
          %s387 = scalar_lea.sflag [#allocation4], %s386
          %s388 = sand.u32 %s128, 1
          %s389 = smul.addr %s388, 8
          %s390 = scalar_lea.vmem [#allocation8], %s389
          %391 = dma.done %s387, 128
        $region60: #{tpu_custom_call.1} parent=55 // pred_fallthru
          _
      $region56: #{tpu_custom_call.1} parent=5 // pred_fallthru
        _
    $region6: #{tpu_custom_call.1} parent=1 // loop_footer
      %s22 = sadd.s32 1, %s18
    $region7: #{tpu_custom_call.1} parent=1 // loop_footer_branch
      %17 = sbr.rel target = $region3
    $region8: #{tpu_custom_call.1} parent=1 // loop_exit
      _
    %392 = vsyncpa [#allocation3], 1
    %s393 = scalar_lea.sflag [#allocation3], 1
    %394 = vsyncpa %s393, 1
    %395 = vsyncpa [#allocation6], 1
    %s396 = scalar_lea.sflag [#allocation6], 1
    %397 = vsyncpa %s396, 1
    %398 = vsyncpa [#allocation4], 1
    %s399 = scalar_lea.sflag [#allocation4], 1
    %400 = vsyncpa %s399, 1

</llo_original>
